<compile_context>
chip_gen: v6e
topology: v6e:2x2x1
jax: 0.10.0
libtpu: 0.0.40
codegen_flags: <defaults>
</compile_context>

<pallas_src>
import jax
import jax.numpy as jnp
from jax.experimental import pallas as pl
from jax.experimental.pallas import tpu as pltpu

HIDDEN = 16    # self.hiddenSize in the torch module
LANE = 128     # TPU lane width
SUB = 8        # TPU sublane width


def _round_up(a, b):
    return -(-a // b) * b


# ----------------------------------------------------------------------------
# Kernel: one (batch tile, module group) step.
#   h1 = tanhshrink(x_g  @ W1_g + b1_g)
#   h2 = tanhshrink(h1   @ W2_g + b2_g)
#   m_g = h2 @ W3m_g + b3m_g                  (torch concat layout, padded)
#   c  += h2 @ W3c_g + b3c_g                  (cmMat folded into W3 host-side)
# ----------------------------------------------------------------------------
def _flux_kernel(x_ref, w1_ref, b1_ref, w2_ref, b2_ref,
                 w3m_ref, b3m_ref, w3c_ref, b3c_ref,
                 m_ref, c_ref):
    g = pl.program_id(1)
    wdt = w1_ref.dtype                       # MXU operand dtype (f32 or bf16)

    h = jnp.dot(x_ref[...], w1_ref[...], preferred_element_type=jnp.float32)
    h = h + b1_ref[0:1, :]
    h = h - jnp.tanh(h)                      # Tanhshrink (f32 on VPU/EUP)

    h = jnp.dot(h.astype(wdt), w2_ref[...], preferred_element_type=jnp.float32)
    h = h + b2_ref[0:1, :]
    h = h - jnp.tanh(h)

    hc = h.astype(wdt)
    # m and c both issue off h2: no serial m -> c dependency on the MXU.
    m_ref[...] = (jnp.dot(hc, w3m_ref[...], preferred_element_type=jnp.float32)
                  + b3m_ref[0:1, :])
    c_blk = (jnp.dot(hc, w3c_ref[...], preferred_element_type=jnp.float32)
             + b3c_ref[0:1, :])

    @pl.when(g == 0)
    def _():
        c_ref[...] = c_blk

    @pl.when(g != 0)
    def _():
        c_ref[...] = c_ref[...] + c_blk


# ----------------------------------------------------------------------------
# Parameter init (torch.nn.Linear-style uniform init, per module).
# ----------------------------------------------------------------------------
def init_params(key, n_modules, f_in, f_out):
    keys = jax.random.split(key, 6)

    def u(k, shape, fan_in):
        bound = 1.0 / jnp.sqrt(jnp.float32(fan_in))
        return jax.random.uniform(k, shape, jnp.float32, -bound, bound)

    w1 = u(keys[0], (n_modules, HIDDEN, f_in), f_in)
    b1 = u(keys[1], (n_modules, 1, HIDDEN), f_in)
    w2 = u(keys[2], (n_modules, HIDDEN, HIDDEN), HIDDEN)
    b2 = u(keys[3], (n_modules, 1, HIDDEN), HIDDEN)
    w3 = u(keys[4], (n_modules, f_out, HIDDEN), HIDDEN)
    b3 = u(keys[5], (n_modules, 1, f_out), HIDDEN)
    return (w1, b1, w2, b2, w3, b3)


# ----------------------------------------------------------------------------
# Host-side packing: grouped block-diagonal, pre-transposed, lane-padded,
# cmMat folded into layer 3.  All padding is exact math (zeros).
# ----------------------------------------------------------------------------
def _pack_operands(params, cmMat, n_modules, n_genes, f_out, n_comps,
                   modules_per_group, weight_dtype):
    w1, b1, w2, b2, w3, b3 = [jnp.asarray(p, jnp.float32) for p in params]
    cmMat = jnp.asarray(cmMat, jnp.float32)

    H = HIDDEN
    P = modules_per_group
    G = -(-n_modules // P)
    Mp = G * P
    padm = Mp - n_modules

    pad_mod = lambda a: jnp.pad(a, ((0, padm), (0, 0), (0, 0)))
    w1, b1, w2, b2, w3, b3 = map(pad_mod, (w1, b1, w2, b2, w3, b3))
    cm_t = jnp.pad(cmMat.T, ((0, padm * f_out), (0, 0)))     # (Mp*f_out, n_comps)

    Kg = P * n_genes
    Kgp = _round_up(Kg, LANE)
    GH = P * H                                # group hidden width (=128 for P=8)
    Fg = P * f_out
    Fp = _round_up(Fg, LANE)
    Cp = _round_up(max(n_comps, 1), LANE)

    eye = jnp.eye(P, dtype=jnp.float32)

    def grouped_block_diag(blocks):           # (G, P, r, c) -> (G, P*r, P*c)
        g_, p_, r_, c_ = blocks.shape
        return jnp.einsum('ij,giab->giajb', eye, blocks).reshape(g_, p_ * r_, p_ * c_)

    # Layer 1: (in, out) layout so the kernel does x @ W (no in-kernel .T).
    w1t = jnp.swapaxes(w1, 1, 2).reshape(G, P, n_genes, H)
    w1bd = grouped_block_diag(w1t)                              # (G, Kg, GH)
    w1bd = jnp.pad(w1bd, ((0, 0), (0, Kgp - Kg), (0, 0)))       # lane-align K
    w1_all = w1bd.reshape(G * Kgp, GH).astype(weight_dtype)

    # Layer 2.
    w2t = jnp.swapaxes(w2, 1, 2).reshape(G, P, H, H)
    w2_all = grouped_block_diag(w2t).reshape(G * GH, GH).astype(weight_dtype)

    # Layer 3: m-head (padded to lane-dense) and cmMat-folded c-head.
    w3t = jnp.swapaxes(w3, 1, 2).reshape(G, P, H, f_out)
    w3bd = grouped_block_diag(w3t)                              # (G, GH, Fg)
    w3m_all = jnp.pad(w3bd, ((0, 0), (0, 0), (0, Fp - Fg))
                      ).reshape(G * GH, Fp).astype(weight_dtype)

    cm_g = cm_t.reshape(G, Fg, n_comps)
    w3c = jnp.einsum('gkf,gfc->gkc', w3bd, cm_g)                # (G, GH, n_comps)
    w3c_all = jnp.pad(w3c, ((0, 0), (0, 0), (0, Cp - n_comps))
                      ).reshape(G * GH, Cp).astype(weight_dtype)

    # Biases (kept f32; broadcast to 8 sublanes so BlockSpecs stay (8, 128k)).
    def sub8(b2d):
        g_, w_ = b2d.shape
        return jnp.broadcast_to(b2d[:, None, :], (g_, SUB, w_)).reshape(g_ * SUB, w_)

    b1_all = sub8(b1.reshape(G, GH))
    b2_all = sub8(b2.reshape(G, GH))
    b3g = b3.reshape(G, Fg)
    b3m_all = sub8(jnp.pad(b3g, ((0, 0), (0, Fp - Fg))))
    b3c = jnp.einsum('gf,gfc->gc', b3g, cm_g)                   # (G, n_comps)
    b3c_all = sub8(jnp.pad(b3c, ((0, 0), (0, Cp - n_comps))))

    dims = dict(G=G, P=P, Mp=Mp, Kg=Kg, Kgp=Kgp, GH=GH, Fg=Fg, Fp=Fp, Cp=Cp)
    ops = (w1_all, b1_all, w2_all, b2_all, w3m_all, b3m_all, w3c_all, b3c_all)
    return ops, dims


def _pack_x(x, n_modules, n_genes, dims, dtype):
    batch = x.shape[0]
    G, Kg, Kgp, Mp = dims['G'], dims['Kg'], dims['Kgp'], dims['Mp']
    x = jnp.asarray(x, jnp.float32)
    x = jnp.pad(x, ((0, 0), (0, (Mp - n_modules) * n_genes)))   # pad modules
    x = x.reshape(batch, G, Kg)
    x = jnp.pad(x, ((0, 0), (0, 0), (0, Kgp - Kg)))             # lane-align K
    return x.reshape(batch, G * Kgp).astype(dtype)


# ----------------------------------------------------------------------------
# Forward
# ----------------------------------------------------------------------------
def flux_forward(x, params, n_modules, n_genes, n_comps, cmMat,
                 compute_dtype=jnp.float32, modules_per_group=None):
    batch = x.shape[0]
    f_in = params[0].shape[-1]
    f_out = params[4].shape[-2]
    assert f_in == n_genes and x.shape[1] == n_modules * n_genes

    if modules_per_group is None:
        # P*HIDDEN == 128 lanes; on v6e/v7x 2*LANE//HIDDEN (=16) fills N=256 MXU.
        modules_per_group = max(1, LANE // HIDDEN)

    ops, d = _pack_operands(params, cmMat, n_modules, n_genes, f_out, n_comps,
                            modules_per_group, compute_dtype)
    (w1_all, b1_all, w2_all, b2_all,
     w3m_all, b3m_all, w3c_all, b3c_all) = ops
    G, Kgp, GH, Fg, Fp, Cp, Mp = (d['G'], d['Kgp'], d['GH'], d['Fg'],
                                  d['Fp'], d['Cp'], d['Mp'])

    x_p = _pack_x(x, n_modules, n_genes, d, compute_dtype)

    # ---- batch tile + explicit VMEM budget (per-generation safe) -----------
    wb = jnp.dtype(compute_dtype).itemsize
    const_bytes = 2 * (Kgp * GH * wb + GH * GH * wb + GH * Fp * wb + GH * Cp * wb
                       + SUB * (GH + GH + Fp + Cp) * 4)          # 2x buffered weights
    row_bytes = 2 * (Kgp * wb + (Fp + Cp) * 4)                   # 2x buffered x/m/c rows
    budget = 48 << 20                                            # fits v7x's 64 MiB VMEM
    avail = max(budget - const_bytes, 0)
    tb_cap = max(SUB, min(1024, (avail // max(row_bytes, 1)) // SUB * SUB))

    batch8 = _round_up(batch, SUB)
    if batch8 >= 2 * SUB:
        tb = _round_up(-(-batch8 // 2), SUB)   # >=2 batch tiles -> both v7x TCs
    else:
        tb = batch8
    tb = min(tb, tb_cap)
    padded = _round_up(batch, tb)
    n_tiles = padded // tb
    if padded != batch:
        x_p = jnp.pad(x_p, ((0, padded - batch), (0, 0)))

    vmem_limit = int(min(max(const_bytes + tb * row_bytes + (8 << 20), 32 << 20),
                         64 << 20))

    m_p, c_p = pl.pallas_call(
        _flux_kernel,
        out_shape=(
            jax.ShapeDtypeStruct((padded, G * Fp), jnp.float32),
            jax.ShapeDtypeStruct((padded, Cp), jnp.float32),
        ),
        grid_spec=pltpu.PrefetchScalarGridSpec(
            num_scalar_prefetch=0,
            grid=(n_tiles, G),                     # (parallel batch, arbitrary group)
            in_specs=[
                pl.BlockSpec((tb, Kgp), lambda i, g: (i, g)),     # x group slab
                pl.BlockSpec((Kgp, GH), lambda i, g: (g, 0)),     # W1_g
                pl.BlockSpec((SUB, GH), lambda i, g: (g, 0)),     # b1_g
                pl.BlockSpec((GH, GH), lambda i, g: (g, 0)),      # W2_g
                pl.BlockSpec((SUB, GH), lambda i, g: (g, 0)),     # b2_g
                pl.BlockSpec((GH, Fp), lambda i, g: (g, 0)),      # W3_g (m head)
                pl.BlockSpec((SUB, Fp), lambda i, g: (g, 0)),     # b3_g (m head)
                pl.BlockSpec((GH, Cp), lambda i, g: (g, 0)),      # W3_g @ cmMat^T
                pl.BlockSpec((SUB, Cp), lambda i, g: (g, 0)),     # b3_g @ cmMat^T
            ],
            out_specs=[
                pl.BlockSpec((tb, Fp), lambda i, g: (i, g)),      # m (lane-dense)
                pl.BlockSpec((tb, Cp), lambda i, g: (i, 0)),      # c (accumulated)
            ],
        ),
        compiler_params=pltpu.CompilerParams(
            dimension_semantics=("parallel", "arbitrary"),
            vmem_limit_bytes=vmem_limit,
        ),
    )(x_p, w1_all, b1_all, w2_all, b2_all, w3m_all, b3m_all, w3c_all, b3c_all)

    # Strip all padding (batch rows, per-group lane padding, padded modules).
    m = m_p[:batch].reshape(batch, G, Fp)[:, :, :Fg].reshape(batch, Mp * f_out)
    m = m[:, :n_modules * f_out]
    c = c_p[:batch, :n_comps]
    return m, c


# ----------------------------------------------------------------------------
# Pure-JAX replica of the torch forward (for verification).
# ----------------------------------------------------------------------------
def flux_reference(x, params, n_modules, n_genes, n_comps, cmMat):
    w1, b1, w2, b2, w3, b3 = params
    ms = []
    for i in range(n_modules):
        xb = x[:, i * n_genes:(i + 1) * n_genes]
        h = xb @ w1[i].T + b1[i, 0]
        h = h - jnp.tanh(h)
        h = h @ w2[i].T + b2[i, 0]
        h = h - jnp.tanh(h)
        ms.append(h @ w3[i].T + b3[i, 0])
    m = jnp.concatenate(ms, axis=1)
    c = m @ cmMat.T
    return m, c


if __name__ == "__main__":
    import numpy as np

    key = jax.random.PRNGKey(0)
    k1, k2, k3, k4, k5, k6 = jax.random.split(key, 6)

    # --- Test 1: toy scFEA sizes, single module group, f32 operands ---------
    batch, n_modules, n_genes, n_comps, f_out = 8, 4, 50, 3, 1
    x = jax.random.normal(k1, (batch, n_modules * n_genes), jnp.float32)
    cmMat = jax.random.normal(k2, (n_comps, n_modules * f_out), jnp.float32)
    params = init_params(k3, n_modules, n_genes, f_out)

    m, c = flux_forward(x, params, n_modules, n_genes, n_comps, cmMat)
    jax.block_until_ready((m, c))
    m_ref, c_ref = flux_reference(x, params, n_modules, n_genes, n_comps, cmMat)
    np.testing.assert_allclose(np.asarray(m), np.asarray(m_ref), rtol=1e-4, atol=1e-4)
    np.testing.assert_allclose(np.asarray(c), np.asarray(c_ref), rtol=1e-4, atol=1e-4)

    # --- Test 2: multi-group (G=2), multi batch tile, bf16 MXU operands -----
    batch, n_modules, n_genes, n_comps, f_out = 20, 12, 50, 5, 1
    x = jax.random.normal(k4, (batch, n_modules * n_genes), jnp.float32)
    cmMat = jax.random.normal(k5, (n_comps, n_modules * f_out), jnp.float32)
    params = init_params(k6, n_modules, n_genes, f_out)

    m, c = flux_forward(x, params, n_modules, n_genes, n_comps, cmMat,
                        compute_dtype=jnp.bfloat16)
    jax.block_until_ready((m, c))
    m_ref, c_ref = flux_reference(x, params, n_modules, n_genes, n_comps, cmMat)
    np.testing.assert_allclose(np.asarray(m), np.asarray(m_ref), rtol=3e-2, atol=3e-2)
    np.testing.assert_allclose(np.asarray(c), np.asarray(c_ref), rtol=3e-2, atol=3e-2)

    print("KERNEL_OK")
</pallas_src>

<mosaic_0001>
module attributes {stable_mosaic.version = 11 : i64} {
  func.func @_flux_kernel(%arg0: i32, %arg1: i32, %arg2: memref<8x512xf32, #tpu.memory_space<vmem>>, %arg3: memref<512x128xf32, #tpu.memory_space<vmem>>, %arg4: memref<8x128xf32, #tpu.memory_space<vmem>>, %arg5: memref<128x128xf32, #tpu.memory_space<vmem>>, %arg6: memref<8x128xf32, #tpu.memory_space<vmem>>, %arg7: memref<128x128xf32, #tpu.memory_space<vmem>>, %arg8: memref<8x128xf32, #tpu.memory_space<vmem>>, %arg9: memref<128x128xf32, #tpu.memory_space<vmem>>, %arg10: memref<8x128xf32, #tpu.memory_space<vmem>>, %arg11: memref<8x128xf32, #tpu.memory_space<vmem>>, %arg12: memref<8x128xf32, #tpu.memory_space<vmem>>) attributes {dimension_semantics = [#tpu.dimension_semantics<parallel>, #tpu.dimension_semantics<arbitrary>], iteration_bounds = array<i64: 1, 1>, scalar_prefetch = 0 : i64, scratch_operands = 0 : i64, tpu.core_type = #tpu.core_type<tc>, window_params = [{transform_indices = @transform_0, window_bounds = array<i64: 8, 512>}, {transform_indices = @transform_1, window_bounds = array<i64: 512, 128>}, {transform_indices = @transform_2, window_bounds = array<i64: 8, 128>}, {transform_indices = @transform_3, window_bounds = array<i64: 128, 128>}, {transform_indices = @transform_4, window_bounds = array<i64: 8, 128>}, {transform_indices = @transform_5, window_bounds = array<i64: 128, 128>}, {transform_indices = @transform_6, window_bounds = array<i64: 8, 128>}, {transform_indices = @transform_7, window_bounds = array<i64: 128, 128>}, {transform_indices = @transform_8, window_bounds = array<i64: 8, 128>}, {transform_indices = @transform_9, window_bounds = array<i64: 8, 128>}, {transform_indices = @transform_10, window_bounds = array<i64: 8, 128>}]} {
    %c0 = arith.constant 0 : index
    %c0_0 = arith.constant 0 : index
    %0 = vector.load %arg2[%c0, %c0_0] : memref<8x512xf32, #tpu.memory_space<vmem>>, vector<8x512xf32>
    %c0_1 = arith.constant 0 : index
    %c0_2 = arith.constant 0 : index
    %1 = vector.load %arg3[%c0_1, %c0_2] : memref<512x128xf32, #tpu.memory_space<vmem>>, vector<512x128xf32>
    %cst = arith.constant dense<0.000000e+00> : vector<8x128xf32>
    %2 = tpu.matmul %0, %1, %cst {dimension_numbers = #tpu.dot_dimension_numbers<[1], [0], [0], [1], [0, 0, 1, 1], [], []>} : vector<8x512xf32>, vector<512x128xf32>, vector<8x128xf32> -> vector<8x128xf32>
    %c0_3 = arith.constant 0 : index
    %c0_4 = arith.constant 0 : index
    %3 = vector.load %arg4[%c0_3, %c0_4] : memref<8x128xf32, #tpu.memory_space<vmem>>, vector<1x128xf32>
    %4 = vector.broadcast %3 : vector<1x128xf32> to vector<8x128xf32>
    %5 = arith.addf %2, %4 : vector<8x128xf32>
    %6 = math.tanh %5 : vector<8x128xf32>
    %7 = arith.subf %5, %6 : vector<8x128xf32>
    %c0_5 = arith.constant 0 : index
    %c0_6 = arith.constant 0 : index
    %8 = vector.load %arg5[%c0_5, %c0_6] : memref<128x128xf32, #tpu.memory_space<vmem>>, vector<128x128xf32>
    %cst_7 = arith.constant dense<0.000000e+00> : vector<8x128xf32>
    %9 = tpu.matmul %7, %8, %cst_7 {dimension_numbers = #tpu.dot_dimension_numbers<[1], [0], [0], [1], [0, 0, 1, 1], [], []>} : vector<8x128xf32>, vector<128x128xf32>, vector<8x128xf32> -> vector<8x128xf32>
    %c0_8 = arith.constant 0 : index
    %c0_9 = arith.constant 0 : index
    %10 = vector.load %arg6[%c0_8, %c0_9] : memref<8x128xf32, #tpu.memory_space<vmem>>, vector<1x128xf32>
    %11 = vector.broadcast %10 : vector<1x128xf32> to vector<8x128xf32>
    %12 = arith.addf %9, %11 : vector<8x128xf32>
    %13 = math.tanh %12 : vector<8x128xf32>
    %14 = arith.subf %12, %13 : vector<8x128xf32>
    %c0_10 = arith.constant 0 : index
    %c0_11 = arith.constant 0 : index
    %15 = vector.load %arg7[%c0_10, %c0_11] : memref<128x128xf32, #tpu.memory_space<vmem>>, vector<128x128xf32>
    %cst_12 = arith.constant dense<0.000000e+00> : vector<8x128xf32>
    %16 = tpu.matmul %14, %15, %cst_12 {dimension_numbers = #tpu.dot_dimension_numbers<[1], [0], [0], [1], [0, 0, 1, 1], [], []>} : vector<8x128xf32>, vector<128x128xf32>, vector<8x128xf32> -> vector<8x128xf32>
    %c0_13 = arith.constant 0 : index
    %c0_14 = arith.constant 0 : index
    %17 = vector.load %arg8[%c0_13, %c0_14] : memref<8x128xf32, #tpu.memory_space<vmem>>, vector<1x128xf32>
    %18 = vector.broadcast %17 : vector<1x128xf32> to vector<8x128xf32>
    %19 = arith.addf %16, %18 : vector<8x128xf32>
    %c0_15 = arith.constant 0 : index
    %c0_16 = arith.constant 0 : index
    %20 = vector.load %arg11[%c0_15, %c0_16] : memref<8x128xf32, #tpu.memory_space<vmem>>, vector<8x128xf32>
    tpu.vector_store %arg11[%c0_15, %c0_16], %19 {strides = array<i32>} : memref<8x128xf32, #tpu.memory_space<vmem>>, vector<8x128xf32>,
    %c0_17 = arith.constant 0 : index
    %c0_18 = arith.constant 0 : index
    %21 = vector.load %arg9[%c0_17, %c0_18] : memref<128x128xf32, #tpu.memory_space<vmem>>, vector<128x128xf32>
    %cst_19 = arith.constant dense<0.000000e+00> : vector<8x128xf32>
    %22 = tpu.matmul %14, %21, %cst_19 {dimension_numbers = #tpu.dot_dimension_numbers<[1], [0], [0], [1], [0, 0, 1, 1], [], []>} : vector<8x128xf32>, vector<128x128xf32>, vector<8x128xf32> -> vector<8x128xf32>
    %c0_20 = arith.constant 0 : index
    %c0_21 = arith.constant 0 : index
    %23 = vector.load %arg10[%c0_20, %c0_21] : memref<8x128xf32, #tpu.memory_space<vmem>>, vector<1x128xf32>
    %24 = vector.broadcast %23 : vector<1x128xf32> to vector<8x128xf32>
    %25 = arith.addf %22, %24 : vector<8x128xf32>
    %c0_i32 = arith.constant 0 : i32
    %26 = arith.cmpi eq, %arg1, %c0_i32 : i32
    %27 = arith.extui %26 : i1 to i32
    %c0_i32_22 = arith.constant 0 : i32
    %28 = arith.cmpi ne, %27, %c0_i32_22 : i32
    scf.if %28 {
      %c0_25 = arith.constant 0 : index
      %c0_26 = arith.constant 0 : index
      %32 = vector.load %arg12[%c0_25, %c0_26] : memref<8x128xf32, #tpu.memory_space<vmem>>, vector<8x128xf32>
      tpu.vector_store %arg12[%c0_25, %c0_26], %25 {strides = array<i32>} : memref<8x128xf32, #tpu.memory_space<vmem>>, vector<8x128xf32>,
    } else {
    }
    %c0_i32_23 = arith.constant 0 : i32
    %29 = arith.cmpi ne, %arg1, %c0_i32_23 : i32
    %30 = arith.extui %29 : i1 to i32
    %c0_i32_24 = arith.constant 0 : i32
    %31 = arith.cmpi ne, %30, %c0_i32_24 : i32
    scf.if %31 {
      %c0_25 = arith.constant 0 : index
      %c0_26 = arith.constant 0 : index
      %32 = vector.load %arg12[%c0_25, %c0_26] : memref<8x128xf32, #tpu.memory_space<vmem>>, vector<8x128xf32>
      %33 = arith.addf %32, %25 : vector<8x128xf32>
      %c0_27 = arith.constant 0 : index
      %c0_28 = arith.constant 0 : index
      %34 = vector.load %arg12[%c0_27, %c0_28] : memref<8x128xf32, #tpu.memory_space<vmem>>, vector<8x128xf32>
      tpu.vector_store %arg12[%c0_27, %c0_28], %33 {strides = array<i32>} : memref<8x128xf32, #tpu.memory_space<vmem>>, vector<8x128xf32>,
    } else {
    }
    return
  }
  func.func @transform_0(%arg0: i32, %arg1: i32) -> (i32, i32) {
    %c0_i32 = arith.constant 0 : i32
    return %arg0, %arg1 : i32, i32
  }
  func.func @transform_1(%arg0: i32, %arg1: i32) -> (i32, i32) {
    %c0_i32 = arith.constant 0 : i32
    %c0_i32_0 = arith.constant 0 : i32
    return %arg1, %c0_i32 : i32, i32
  }
  func.func @transform_2(%arg0: i32, %arg1: i32) -> (i32, i32) {
    %c0_i32 = arith.constant 0 : i32
    %c0_i32_0 = arith.constant 0 : i32
    return %arg1, %c0_i32 : i32, i32
  }
  func.func @transform_3(%arg0: i32, %arg1: i32) -> (i32, i32) {
    %c0_i32 = arith.constant 0 : i32
    %c0_i32_0 = arith.constant 0 : i32
    return %arg1, %c0_i32 : i32, i32
  }
  func.func @transform_4(%arg0: i32, %arg1: i32) -> (i32, i32) {
    %c0_i32 = arith.constant 0 : i32
    %c0_i32_0 = arith.constant 0 : i32
    return %arg1, %c0_i32 : i32, i32
  }
  func.func @transform_5(%arg0: i32, %arg1: i32) -> (i32, i32) {
    %c0_i32 = arith.constant 0 : i32
    %c0_i32_0 = arith.constant 0 : i32
    return %arg1, %c0_i32 : i32, i32
  }
  func.func @transform_6(%arg0: i32, %arg1: i32) -> (i32, i32) {
    %c0_i32 = arith.constant 0 : i32
    %c0_i32_0 = arith.constant 0 : i32
    return %arg1, %c0_i32 : i32, i32
  }
  func.func @transform_7(%arg0: i32, %arg1: i32) -> (i32, i32) {
    %c0_i32 = arith.constant 0 : i32
    %c0_i32_0 = arith.constant 0 : i32
    return %arg1, %c0_i32 : i32, i32
  }
  func.func @transform_8(%arg0: i32, %arg1: i32) -> (i32, i32) {
    %c0_i32 = arith.constant 0 : i32
    %c0_i32_0 = arith.constant 0 : i32
    return %arg1, %c0_i32 : i32, i32
  }
  func.func @transform_9(%arg0: i32, %arg1: i32) -> (i32, i32) {
    %c0_i32 = arith.constant 0 : i32
    return %arg0, %arg1 : i32, i32
  }
  func.func @transform_10(%arg0: i32, %arg1: i32) -> (i32, i32) {
    %c0_i32 = arith.constant 0 : i32
    %c0_i32_0 = arith.constant 0 : i32
    return %arg0, %c0_i32 : i32, i32
  }
}

</mosaic_0001>

<llo_original>
// kernel: tpu_custom_call.1
$region0: #{tpu_custom_call.1}
  #allocation0 [shape = 'u32[]', space=smem, size = 0x4, offset = 0x4, fixed_abs, tag = 'smem constant byte address 0x4 - core index']
  #allocation1 [shape = 'u32[144,128]{1,0:T(1,128)}', space=vmem, size = 0x12000, scoped, tag = 'internal scratch']
  %s0 = inlined_call_operand.hbm [shape: f32[8,512], index: 0, kind: input, shape index: {}]
  %s1 = inlined_call_operand.hbm [shape: f32[512,128], index: 1, kind: input, shape index: {}]
  %s2 = inlined_call_operand.hbm [shape: f32[8,128], index: 2, kind: input, shape index: {}]
  %s3 = inlined_call_operand.hbm [shape: f32[128,128], index: 3, kind: input, shape index: {}]
  %s4 = inlined_call_operand.hbm [shape: f32[8,128], index: 4, kind: input, shape index: {}]
  %s5 = inlined_call_operand.hbm [shape: f32[128,128], index: 5, kind: input, shape index: {}]
  %s6 = inlined_call_operand.vmem [shape: f32[8,128], index: 6, kind: input, shape index: {}]
  %s7 = inlined_call_operand.hbm [shape: f32[128,128], index: 7, kind: input, shape index: {}]
  %s8 = inlined_call_operand.hbm [shape: f32[8,128], index: 8, kind: input, shape index: {}]
  %s9 = inlined_call_operand.hbm [shape: f32[8,128], index: 9, kind: output, shape index: {0}]
  %s10 = inlined_call_operand.hbm [shape: f32[8,128], index: 10, kind: output, shape index: {1}]
  %11 = xla_tuple %s9, %s10
  %s12 = sld [smem:[#allocation0]]
  $region94: #{tpu_custom_call.1} parent=0
    _
  %s14 = ssub.s32 1, %s12
  %s15 = scalar_select 0, %s14, %s12
  $region1: #{tpu_custom_call.1} parent=0
    #allocation2 [shape = 'u8[16384]{0}', space=vmem, size = 0x4000, scoped, tag = 'input window, operand 0, single buffered']
    #allocation3 [shape = 's32[1]{0}', space=sflag, size = 0x4, scoped, tag = 'scoped memory for tpu_custom_call.1']
    #allocation4 [shape = 's32[1]{0}', space=sflag, size = 0x4, scoped, tag = 'scoped memory for tpu_custom_call.1']
    #allocation5 [shape = 'u8[262144]{0}', space=vmem, size = 0x40000, scoped, tag = 'input window, operand 1, single buffered']
    #allocation6 [shape = 's32[1]{0}', space=sflag, size = 0x4, scoped, tag = 'scoped memory for tpu_custom_call.1']
    #allocation7 [shape = 'u8[4096]{0}', space=vmem, size = 0x1000, scoped, tag = 'input window, operand 2, single buffered']
    #allocation8 [shape = 'u8[65536]{0}', space=vmem, size = 0x10000, scoped, tag = 'input window, operand 3, single buffered']
    #allocation9 [shape = 's32[1]{0}', space=sflag, size = 0x4, scoped, tag = 'scoped memory for tpu_custom_call.1']
    #allocation10 [shape = 'u8[4096]{0}', space=vmem, size = 0x1000, scoped, tag = 'input window, operand 4, single buffered']
    #allocation11 [shape = 'u8[65536]{0}', space=vmem, size = 0x10000, scoped, tag = 'input window, operand 5, single buffered']
    #allocation12 [shape = 's32[1]{0}', space=sflag, size = 0x4, scoped, tag = 'scoped memory for tpu_custom_call.1']
    #allocation13 [shape = 'u8[65536]{0}', space=vmem, size = 0x10000, scoped, tag = 'input window, operand 7, single buffered']
    #allocation14 [shape = 'u8[4096]{0}', space=vmem, size = 0x1000, scoped, tag = 'input window, operand 8, single buffered']
    #allocation15 [shape = 's32[1]{0}', space=sflag, size = 0x4, scoped, tag = 'scoped memory for tpu_custom_call.1']
    #allocation16 [shape = 'u8[4096]{0}', space=vmem, size = 0x1000, scoped, tag = 'output window, operand 0, single buffered']
    #allocation17 [shape = 'u8[4096]{0}', space=vmem, size = 0x1000, scoped, tag = 'output window, operand 1, single buffered']
    #allocation18 [shape = 's32[1]{0}', space=sflag, size = 0x4, scoped, tag = 'scoped memory for tpu_custom_call.1']
    %16 = vsyncpa [#allocation3], 0
    %17 = vsyncpa [#allocation6], 0
    %18 = vsyncpa [#allocation9], 0
    %19 = vsyncpa [#allocation12], 0
    %20 = vsyncpa [#allocation15], 0
    %21 = vsyncpa [#allocation4], 0
    %22 = vsyncpa [#allocation18], 0
    // Predicated region
    $region2: #{tpu_custom_call.1} parent=1 // pred_check
      _
    $region3: #{tpu_custom_call.1} parent=1 // pred_check_branch
      %24 = sbr.rel (0) target = $region5
    $region4: #{tpu_custom_call.1} parent=1 // pred_region
      %s26 = ssub.s32 512, 512
      %27 = vsyncadd [#allocation3], %s26
      %s29 = sshll.u32 [#allocation2], 4
      %s30 = int_to_ptr.vmem [resolvable:$true] %s29
      %32 = dma.hbm_to_vmem [thread:$0]  %s0, 512, %s30, [#allocation3]
    $region5: #{tpu_custom_call.1} parent=1 // pred_fallthru
      _
    // Predicated region
    $region6: #{tpu_custom_call.1} parent=1 // pred_check
      _
    $region7: #{tpu_custom_call.1} parent=1 // pred_check_branch
      %34 = sbr.rel (0) target = $region9
    $region8: #{tpu_custom_call.1} parent=1 // pred_region
      %s36 = ssub.s32 8192, 8192
      %37 = vsyncadd [#allocation6], %s36
      %s38 = sshll.u32 [#allocation5], 4
      %s39 = int_to_ptr.vmem [resolvable:$true] %s38
      %44 = dma.hbm_to_vmem [thread:$0]  %s1, 8192, %s39, [#allocation6], 128, 128, 8
    $region9: #{tpu_custom_call.1} parent=1 // pred_fallthru
      _
    // Predicated region
    $region10: #{tpu_custom_call.1} parent=1 // pred_check
      _
    $region11: #{tpu_custom_call.1} parent=1 // pred_check_branch
      %46 = sbr.rel (0) target = $region13
    $region12: #{tpu_custom_call.1} parent=1 // pred_region
      %s48 = ssub.s32 128, 128
      %49 = vsyncadd [#allocation6], %s48
      %s51 = sshll.u32 [#allocation7], 4
      %s52 = int_to_ptr.vmem [resolvable:$true] %s51
      %54 = dma.hbm_to_vmem [thread:$0]  %s2, 128, %s52, [#allocation6]
    $region13: #{tpu_custom_call.1} parent=1 // pred_fallthru
      _
    // Predicated region
    $region14: #{tpu_custom_call.1} parent=1 // pred_check
      _
    $region15: #{tpu_custom_call.1} parent=1 // pred_check_branch
      %56 = sbr.rel (0) target = $region17
    $region16: #{tpu_custom_call.1} parent=1 // pred_region
      %s58 = ssub.s32 2048, 2048
      %59 = vsyncadd [#allocation9], %s58
      %s60 = sshll.u32 [#allocation8], 4
      %s61 = int_to_ptr.vmem [resolvable:$true] %s60
      %66 = dma.hbm_to_vmem [thread:$0]  %s3, 2048, %s61, [#allocation9], 128, 128, 8
    $region17: #{tpu_custom_call.1} parent=1 // pred_fallthru
      _
    // Predicated region
    $region18: #{tpu_custom_call.1} parent=1 // pred_check
      _
    $region19: #{tpu_custom_call.1} parent=1 // pred_check_branch
      %68 = sbr.rel (0) target = $region21
    $region20: #{tpu_custom_call.1} parent=1 // pred_region
      %s70 = ssub.s32 128, 128
      %71 = vsyncadd [#allocation9], %s70
      %s73 = sshll.u32 [#allocation10], 4
      %s74 = int_to_ptr.vmem [resolvable:$true] %s73
      %76 = dma.hbm_to_vmem [thread:$0]  %s4, 128, %s74, [#allocation9]
    $region21: #{tpu_custom_call.1} parent=1 // pred_fallthru
      _
    // Predicated region
    $region22: #{tpu_custom_call.1} parent=1 // pred_check
      _
    $region23: #{tpu_custom_call.1} parent=1 // pred_check_branch
      %78 = sbr.rel (0) target = $region25
    $region24: #{tpu_custom_call.1} parent=1 // pred_region
      %s80 = ssub.s32 2048, 2048
      %81 = vsyncadd [#allocation12], %s80
      %s82 = sshll.u32 [#allocation11], 4
      %s83 = int_to_ptr.vmem [resolvable:$true] %s82
      %88 = dma.hbm_to_vmem [thread:$0]  %s5, 2048, %s83, [#allocation12], 128, 128, 8
    $region25: #{tpu_custom_call.1} parent=1 // pred_fallthru
      _
    // Predicated region
    $region26: #{tpu_custom_call.1} parent=1 // pred_check
      _
    $region27: #{tpu_custom_call.1} parent=1 // pred_check_branch
      %90 = sbr.rel (0) target = $region29
    $region28: #{tpu_custom_call.1} parent=1 // pred_region
      _
    $region29: #{tpu_custom_call.1} parent=1 // pred_fallthru
      _
    // Predicated region
    $region30: #{tpu_custom_call.1} parent=1 // pred_check
      _
    $region31: #{tpu_custom_call.1} parent=1 // pred_check_branch
      %92 = sbr.rel (0) target = $region33
    $region32: #{tpu_custom_call.1} parent=1 // pred_region
      %s94 = ssub.s32 2048, 2048
      %95 = vsyncadd [#allocation12], %s94
      %s96 = sshll.u32 [#allocation13], 4
      %s97 = int_to_ptr.vmem [resolvable:$true] %s96
      %102 = dma.hbm_to_vmem [thread:$0]  %s7, 2048, %s97, [#allocation12], 128, 128, 8
    $region33: #{tpu_custom_call.1} parent=1 // pred_fallthru
      _
    // Predicated region
    $region34: #{tpu_custom_call.1} parent=1 // pred_check
      _
    $region35: #{tpu_custom_call.1} parent=1 // pred_check_branch
      %104 = sbr.rel (0) target = $region37
    $region36: #{tpu_custom_call.1} parent=1 // pred_region
      %s106 = ssub.s32 128, 128
      %107 = vsyncadd [#allocation15], %s106
      %s109 = sshll.u32 [#allocation14], 4
      %s110 = int_to_ptr.vmem [resolvable:$true] %s109
      %112 = dma.hbm_to_vmem [thread:$0]  %s8, 128, %s110, [#allocation15]
    $region37: #{tpu_custom_call.1} parent=1 // pred_fallthru
      _
    // Predicated region
    $region38: #{tpu_custom_call.1} parent=1 // pred_check
      _
    $region39: #{tpu_custom_call.1} parent=1 // pred_check_branch
      %114 = sbr.rel (0) target = $region41
    $region40: #{tpu_custom_call.1} parent=1 // pred_region
      %115 = dma.done [#allocation3], 512
    $region41: #{tpu_custom_call.1} parent=1 // pred_fallthru
      _
    // Predicated region
    $region42: #{tpu_custom_call.1} parent=1 // pred_check
      _
    $region43: #{tpu_custom_call.1} parent=1 // pred_check_branch
      %117 = sbr.rel (0) target = $region45
    $region44: #{tpu_custom_call.1} parent=1 // pred_region
      %118 = dma.done [#allocation6], 8192
    $region45: #{tpu_custom_call.1} parent=1 // pred_fallthru
      _
    // Predicated region
    $region46: #{tpu_custom_call.1} parent=1 // pred_check
      _
    $region47: #{tpu_custom_call.1} parent=1 // pred_check_branch
      %120 = sbr.rel (0) target = $region49
    $region48: #{tpu_custom_call.1} parent=1 // pred_region
      %121 = dma.done [#allocation6], 128
    $region49: #{tpu_custom_call.1} parent=1 // pred_fallthru
      _
    // Predicated region
    $region50: #{tpu_custom_call.1} parent=1 // pred_check
      _
    $region51: #{tpu_custom_call.1} parent=1 // pred_check_branch
      %123 = sbr.rel (0) target = $region53
    $region52: #{tpu_custom_call.1} parent=1 // pred_region
      %124 = dma.done [#allocation9], 2048
    $region53: #{tpu_custom_call.1} parent=1 // pred_fallthru
      _
    // Predicated region
    $region54: #{tpu_custom_call.1} parent=1 // pred_check
      _
    $region55: #{tpu_custom_call.1} parent=1 // pred_check_branch
      %126 = sbr.rel (0) target = $region57
    $region56: #{tpu_custom_call.1} parent=1 // pred_region
      %127 = dma.done [#allocation9], 128
    $region57: #{tpu_custom_call.1} parent=1 // pred_fallthru
      _
    // Predicated region
    $region58: #{tpu_custom_call.1} parent=1 // pred_check
      _
    $region59: #{tpu_custom_call.1} parent=1 // pred_check_branch
      %129 = sbr.rel (0) target = $region61
    $region60: #{tpu_custom_call.1} parent=1 // pred_region
      %130 = dma.done [#allocation12], 2048
    $region61: #{tpu_custom_call.1} parent=1 // pred_fallthru
      _
    // Predicated region
    $region62: #{tpu_custom_call.1} parent=1 // pred_check
      _
    $region63: #{tpu_custom_call.1} parent=1 // pred_check_branch
      %132 = sbr.rel (0) target = $region65
    $region64: #{tpu_custom_call.1} parent=1 // pred_region
      %133 = dma.done [#allocation12], 2048
    $region65: #{tpu_custom_call.1} parent=1 // pred_fallthru
      _
    // Predicated region
    $region66: #{tpu_custom_call.1} parent=1 // pred_check
      _
    $region67: #{tpu_custom_call.1} parent=1 // pred_check_branch
      %135 = sbr.rel (0) target = $region69
    $region68: #{tpu_custom_call.1} parent=1 // pred_region
      %136 = dma.done [#allocation15], 128
    $region69: #{tpu_custom_call.1} parent=1 // pred_fallthru
      _
    %v137 = vld [vmem:[#allocation2] sm:$0xff]
    %v138 = vld [vmem:[#allocation2 + $0x8] sm:$0xff]
    %v139 = vld [vmem:[#allocation2 + $0x10] sm:$0xff]
    %v140 = vld [vmem:[#allocation2 + $0x18] sm:$0xff]
    %v141 = vld [vmem:[#allocation5] sm:$0xff]
    %v142 = vld [vmem:[#allocation5 + $0x8] sm:$0xff]
    %v143 = vld [vmem:[#allocation5 + $0x10] sm:$0xff]
    %v144 = vld [vmem:[#allocation5 + $0x18] sm:$0xff]
    %v145 = vld [vmem:[#allocation5 + $0x20] sm:$0xff]
    %v146 = vld [vmem:[#allocation5 + $0x28] sm:$0xff]
    %v147 = vld [vmem:[#allocation5 + $0x30] sm:$0xff]
    %v148 = vld [vmem:[#allocation5 + $0x38] sm:$0xff]
    %v149 = vld [vmem:[#allocation5 + $0x40] sm:$0xff]
    %v150 = vld [vmem:[#allocation5 + $0x48] sm:$0xff]
    %v151 = vld [vmem:[#allocation5 + $0x50] sm:$0xff]
    %v152 = vld [vmem:[#allocation5 + $0x58] sm:$0xff]
    %v153 = vld [vmem:[#allocation5 + $0x60] sm:$0xff]
    %v154 = vld [vmem:[#allocation5 + $0x68] sm:$0xff]
    %v155 = vld [vmem:[#allocation5 + $0x70] sm:$0xff]
    %v156 = vld [vmem:[#allocation5 + $0x78] sm:$0xff]
    %v157 = vld [vmem:[#allocation5 + $0x80] sm:$0xff]
    %v158 = vld [vmem:[#allocation5 + $0x88] sm:$0xff]
    %v159 = vld [vmem:[#allocation5 + $0x90] sm:$0xff]
    %v160 = vld [vmem:[#allocation5 + $0x98] sm:$0xff]
    %v161 = vld [vmem:[#allocation5 + $0xa0] sm:$0xff]
    %v162 = vld [vmem:[#allocation5 + $0xa8] sm:$0xff]
    %v163 = vld [vmem:[#allocation5 + $0xb0] sm:$0xff]
    %v164 = vld [vmem:[#allocation5 + $0xb8] sm:$0xff]
    %v165 = vld [vmem:[#allocation5 + $0xc0] sm:$0xff]
    %v166 = vld [vmem:[#allocation5 + $0xc8] sm:$0xff]
    %v167 = vld [vmem:[#allocation5 + $0xd0] sm:$0xff]
    %v168 = vld [vmem:[#allocation5 + $0xd8] sm:$0xff]
    %v169 = vld [vmem:[#allocation5 + $0xe0] sm:$0xff]
    %v170 = vld [vmem:[#allocation5 + $0xe8] sm:$0xff]
    %v171 = vld [vmem:[#allocation5 + $0xf0] sm:$0xff]
    %v172 = vld [vmem:[#allocation5 + $0xf8] sm:$0xff]
    %v173 = vld [vmem:[#allocation5 + $0x100] sm:$0xff]
    %v174 = vld [vmem:[#allocation5 + $0x108] sm:$0xff]
    %v175 = vld [vmem:[#allocation5 + $0x110] sm:$0xff]
    %v176 = vld [vmem:[#allocation5 + $0x118] sm:$0xff]
    %v177 = vld [vmem:[#allocation5 + $0x120] sm:$0xff]
    %v178 = vld [vmem:[#allocation5 + $0x128] sm:$0xff]
    %v179 = vld [vmem:[#allocation5 + $0x130] sm:$0xff]
    %v180 = vld [vmem:[#allocation5 + $0x138] sm:$0xff]
    %v181 = vld [vmem:[#allocation5 + $0x140] sm:$0xff]
    %v182 = vld [vmem:[#allocation5 + $0x148] sm:$0xff]
    %v183 = vld [vmem:[#allocation5 + $0x150] sm:$0xff]
    %v184 = vld [vmem:[#allocation5 + $0x158] sm:$0xff]
    %v185 = vld [vmem:[#allocation5 + $0x160] sm:$0xff]
    %v186 = vld [vmem:[#allocation5 + $0x168] sm:$0xff]
    %v187 = vld [vmem:[#allocation5 + $0x170] sm:$0xff]
    %v188 = vld [vmem:[#allocation5 + $0x178] sm:$0xff]
    %v189 = vld [vmem:[#allocation5 + $0x180] sm:$0xff]
    %v190 = vld [vmem:[#allocation5 + $0x188] sm:$0xff]
    %v191 = vld [vmem:[#allocation5 + $0x190] sm:$0xff]
    %v192 = vld [vmem:[#allocation5 + $0x198] sm:$0xff]
    %v193 = vld [vmem:[#allocation5 + $0x1a0] sm:$0xff]
    %v194 = vld [vmem:[#allocation5 + $0x1a8] sm:$0xff]
    %v195 = vld [vmem:[#allocation5 + $0x1b0] sm:$0xff]
    %v196 = vld [vmem:[#allocation5 + $0x1b8] sm:$0xff]
    %v197 = vld [vmem:[#allocation5 + $0x1c0] sm:$0xff]
    %v198 = vld [vmem:[#allocation5 + $0x1c8] sm:$0xff]
    %v199 = vld [vmem:[#allocation5 + $0x1d0] sm:$0xff]
    %v200 = vld [vmem:[#allocation5 + $0x1d8] sm:$0xff]
    %v201 = vld [vmem:[#allocation5 + $0x1e0] sm:$0xff]
    %v202 = vld [vmem:[#allocation5 + $0x1e8] sm:$0xff]
    %v203 = vld [vmem:[#allocation5 + $0x1f0] sm:$0xff]
    %v204 = vld [vmem:[#allocation5 + $0x1f8] sm:$0xff]
    %v205 = vld [vmem:[#allocation7] sm:$0x1]
    %v206 = vlaneseq
    %v207 = vshrl.u32 %v206, 7
    %v208 = vsub.s32 0, %v207
    %v209 = vrot.slane %v205, %v208
    %210 = vmatprep.subr.mxu0 0.0
    %211 = vmatpush1.msra.mxu0 %v156
    %212 = vmatprep.subr.mxu0 0.0
    %213 = vmatpush1.msra.mxu0 %v155
    %214 = vmatprep.subr.mxu0 0.0
    %215 = vmatpush1.msra.mxu0 %v154
    %216 = vmatprep.subr.mxu0 0.0
    %217 = vmatpush1.msra.mxu0 %v153
    %218 = vmatprep.subr.mxu0 0.0
    %219 = vmatpush1.msra.mxu0 %v152
    %220 = vmatprep.subr.mxu0 0.0
    %221 = vmatpush1.msra.mxu0 %v151
    %222 = vmatprep.subr.mxu0 0.0
    %223 = vmatpush1.msra.mxu0 %v150
    %224 = vmatprep.subr.mxu0 0.0
    %225 = vmatpush1.msra.mxu0 %v149
    %226 = vmatprep.subr.mxu0 0.0
    %227 = vmatpush1.msra.mxu0 %v148
    %228 = vmatprep.subr.mxu0 0.0
    %229 = vmatpush1.msra.mxu0 %v147
    %230 = vmatprep.subr.mxu0 0.0
    %231 = vmatpush1.msra.mxu0 %v146
    %232 = vmatprep.subr.mxu0 0.0
    %233 = vmatpush1.msra.mxu0 %v145
    %234 = vmatprep.subr.mxu0 0.0
    %235 = vmatpush1.msra.mxu0 %v144
    %236 = vmatprep.subr.mxu0 0.0
    %237 = vmatpush1.msra.mxu0 %v143
    %238 = vmatprep.subr.mxu0 0.0
    %239 = vmatpush1.msra.mxu0 %v142
    %240 = vmatprep.subr.mxu0 0.0
    %241 = vmatpush1.msra.mxu0 %v141
    %242 = vmatprep.subr.mxu0 0.0
    %243 = vmatpush2.msra.mxu0 %v172
    %244 = vmatprep.subr.mxu0 0.0
    %245 = vmatpush2.msra.mxu0 %v171
    %246 = vmatprep.subr.mxu0 0.0
    %247 = vmatpush2.msra.mxu0 %v170
    %248 = vmatprep.subr.mxu0 0.0
    %249 = vmatpush2.msra.mxu0 %v169
    %250 = vmatprep.subr.mxu0 0.0
    %251 = vmatpush2.msra.mxu0 %v168
    %252 = vmatprep.subr.mxu0 0.0
    %253 = vmatpush2.msra.mxu0 %v167
    %254 = vmatprep.subr.mxu0 0.0
    %255 = vmatpush2.msra.mxu0 %v166
    %256 = vmatprep.subr.mxu0 0.0
    %257 = vmatpush2.msra.mxu0 %v165
    %258 = vmatprep.subr.mxu0 0.0
    %259 = vmatpush2.msra.mxu0 %v164
    %260 = vmatprep.subr.mxu0 0.0
    %261 = vmatpush2.msra.mxu0 %v163
    %262 = vmatprep.subr.mxu0 0.0
    %263 = vmatpush2.msra.mxu0 %v162
    %264 = vmatprep.subr.mxu0 0.0
    %265 = vmatpush2.msra.mxu0 %v161
    %266 = vmatprep.subr.mxu0 0.0
    %267 = vmatpush2.msra.mxu0 %v160
    %268 = vmatprep.subr.mxu0 0.0
    %269 = vmatpush2.msra.mxu0 %v159
    %270 = vmatprep.subr.mxu0 0.0
    %271 = vmatpush2.msra.mxu0 %v158
    %272 = vmatprep.subr.mxu0 0.0
    %273 = vmatpush2.msra.mxu0 %v157
    %274 = vmatprep.mubr.f32.mxu0 %v138
    %275 = vmatmul.mubr.f32.gmra.mxu0 %v137
    %v276 = vpop.f32.mrf.mxu0
    %v277 = vadd.f32 %v209, %v276
    %v278 = vpop.f32.mrf.mxu0
    %279 = vdwg.mxu0
    %280 = vmatprep.subr.mxu0 0.0
    %281 = vmatpush1.msra.mxu0 %v188
    %282 = vmatprep.subr.mxu0 0.0
    %283 = vmatpush1.msra.mxu0 %v187
    %284 = vmatprep.subr.mxu0 0.0
    %285 = vmatpush1.msra.mxu0 %v186
    %286 = vmatprep.subr.mxu0 0.0
    %287 = vmatpush1.msra.mxu0 %v185
    %288 = vmatprep.subr.mxu0 0.0
    %289 = vmatpush1.msra.mxu0 %v184
    %290 = vmatprep.subr.mxu0 0.0
    %291 = vmatpush1.msra.mxu0 %v183
    %292 = vmatprep.subr.mxu0 0.0
    %293 = vmatpush1.msra.mxu0 %v182
    %294 = vmatprep.subr.mxu0 0.0
    %295 = vmatpush1.msra.mxu0 %v181
    %296 = vmatprep.subr.mxu0 0.0
    %297 = vmatpush1.msra.mxu0 %v180
    %298 = vmatprep.subr.mxu0 0.0
    %299 = vmatpush1.msra.mxu0 %v179
    %300 = vmatprep.subr.mxu0 0.0
    %301 = vmatpush1.msra.mxu0 %v178
    %302 = vmatprep.subr.mxu0 0.0
    %303 = vmatpush1.msra.mxu0 %v177
    %304 = vmatprep.subr.mxu0 0.0
    %305 = vmatpush1.msra.mxu0 %v176
    %306 = vmatprep.subr.mxu0 0.0
    %307 = vmatpush1.msra.mxu0 %v175
    %308 = vmatprep.subr.mxu0 0.0
    %309 = vmatpush1.msra.mxu0 %v174
    %310 = vmatprep.subr.mxu0 0.0
    %311 = vmatpush1.msra.mxu0 %v173
    %312 = vmatprep.subr.mxu0 0.0
    %313 = vmatpush2.msra.mxu0 %v204
    %314 = vmatprep.subr.mxu0 0.0
    %315 = vmatpush2.msra.mxu0 %v203
    %316 = vmatprep.subr.mxu0 0.0
    %317 = vmatpush2.msra.mxu0 %v202
    %318 = vmatprep.subr.mxu0 0.0
    %319 = vmatpush2.msra.mxu0 %v201
    %320 = vmatprep.subr.mxu0 0.0
    %321 = vmatpush2.msra.mxu0 %v200
    %322 = vmatprep.subr.mxu0 0.0
    %323 = vmatpush2.msra.mxu0 %v199
    %324 = vmatprep.subr.mxu0 0.0
    %325 = vmatpush2.msra.mxu0 %v198
    %326 = vmatprep.subr.mxu0 0.0
    %327 = vmatpush2.msra.mxu0 %v197
    %328 = vmatprep.subr.mxu0 0.0
    %329 = vmatpush2.msra.mxu0 %v196
    %330 = vmatprep.subr.mxu0 0.0
    %331 = vmatpush2.msra.mxu0 %v195
    %332 = vmatprep.subr.mxu0 0.0
    %333 = vmatpush2.msra.mxu0 %v194
    %334 = vmatprep.subr.mxu0 0.0
    %335 = vmatpush2.msra.mxu0 %v193
    %336 = vmatprep.subr.mxu0 0.0
    %337 = vmatpush2.msra.mxu0 %v192
    %338 = vmatprep.subr.mxu0 0.0
    %339 = vmatpush2.msra.mxu0 %v191
    %340 = vmatprep.subr.mxu0 0.0
    %341 = vmatpush2.msra.mxu0 %v190
    %342 = vmatprep.subr.mxu0 0.0
    %343 = vmatpush2.msra.mxu0 %v189
    %344 = vmatprep.mubr.f32.mxu0 %v140
    %345 = vmatmul.mubr.f32.gmra.mxu0 %v139
    %v346 = vpop.f32.mrf.mxu0
    %v347 = vadd.f32 %v277, %v346
    %v348 = vpop.f32.mrf.mxu0
    %349 = vdwg.mxu0
    %v350 = vtanh.pop %v347
    %v351 = vsub.f32 %v347, %v350
    %v352 = vld [vmem:[#allocation8] sm:$0xff]
    %v353 = vld [vmem:[#allocation8 + $0x8] sm:$0xff]
    %v354 = vld [vmem:[#allocation8 + $0x10] sm:$0xff]
    %v355 = vld [vmem:[#allocation8 + $0x18] sm:$0xff]
    %v356 = vld [vmem:[#allocation8 + $0x20] sm:$0xff]
    %v357 = vld [vmem:[#allocation8 + $0x28] sm:$0xff]
    %v358 = vld [vmem:[#allocation8 + $0x30] sm:$0xff]
    %v359 = vld [vmem:[#allocation8 + $0x38] sm:$0xff]
    %v360 = vld [vmem:[#allocation8 + $0x40] sm:$0xff]
    %v361 = vld [vmem:[#allocation8 + $0x48] sm:$0xff]
    %v362 = vld [vmem:[#allocation8 + $0x50] sm:$0xff]
    %v363 = vld [vmem:[#allocation8 + $0x58] sm:$0xff]
    %v364 = vld [vmem:[#allocation8 + $0x60] sm:$0xff]
    %v365 = vld [vmem:[#allocation8 + $0x68] sm:$0xff]
    %v366 = vld [vmem:[#allocation8 + $0x70] sm:$0xff]
    %v367 = vld [vmem:[#allocation8 + $0x78] sm:$0xff]
    %v368 = vld [vmem:[#allocation10] sm:$0x1]
    %v369 = vlaneseq
    %v370 = vshrl.u32 %v369, 7
    %v371 = vsub.s32 0, %v370
    %v372 = vrot.slane %v368, %v371
    %373 = vmatprep.subr.mxu0 0.0
    %374 = vmatpush1.msra.mxu0 %v367
    %375 = vmatprep.subr.mxu0 0.0
    %376 = vmatpush1.msra.mxu0 %v366
    %377 = vmatprep.subr.mxu0 0.0
    %378 = vmatpush1.msra.mxu0 %v365
    %379 = vmatprep.subr.mxu0 0.0
    %380 = vmatpush1.msra.mxu0 %v364
    %381 = vmatprep.subr.mxu0 0.0
    %382 = vmatpush1.msra.mxu0 %v363
    %383 = vmatprep.subr.mxu0 0.0
    %384 = vmatpush1.msra.mxu0 %v362
    %385 = vmatprep.subr.mxu0 0.0
    %386 = vmatpush1.msra.mxu0 %v361
    %387 = vmatprep.subr.mxu0 0.0
    %388 = vmatpush1.msra.mxu0 %v360
    %389 = vmatprep.subr.mxu0 0.0
    %390 = vmatpush1.msra.mxu0 %v359
    %391 = vmatprep.subr.mxu0 0.0
    %392 = vmatpush1.msra.mxu0 %v358
    %393 = vmatprep.subr.mxu0 0.0
    %394 = vmatpush1.msra.mxu0 %v357
    %395 = vmatprep.subr.mxu0 0.0
    %396 = vmatpush1.msra.mxu0 %v356
    %397 = vmatprep.subr.mxu0 0.0
    %398 = vmatpush1.msra.mxu0 %v355
    %399 = vmatprep.subr.mxu0 0.0
    %400 = vmatpush1.msra.mxu0 %v354
    %401 = vmatprep.subr.mxu0 0.0
    %402 = vmatpush1.msra.mxu0 %v353
    %403 = vmatprep.subr.mxu0 0.0
    %404 = vmatpush1.msra.mxu0 %v352
    %405 = vmatprep.subr.mxu0 0.0
    %406 = vmatpush2.msra.mxu0 0.0
    %407 = vmatprep.subr.mxu0 0.0
    %408 = vmatpush2.msra.mxu0 0.0
    %409 = vmatprep.subr.mxu0 0.0
    %410 = vmatpush2.msra.mxu0 0.0
    %411 = vmatprep.subr.mxu0 0.0
    %412 = vmatpush2.msra.mxu0 0.0
    %413 = vmatprep.subr.mxu0 0.0
    %414 = vmatpush2.msra.mxu0 0.0
    %415 = vmatprep.subr.mxu0 0.0
    %416 = vmatpush2.msra.mxu0 0.0
    %417 = vmatprep.subr.mxu0 0.0
    %418 = vmatpush2.msra.mxu0 0.0
    %419 = vmatprep.subr.mxu0 0.0
    %420 = vmatpush2.msra.mxu0 0.0
    %421 = vmatprep.subr.mxu0 0.0
    %422 = vmatpush2.msra.mxu0 0.0
    %423 = vmatprep.subr.mxu0 0.0
    %424 = vmatpush2.msra.mxu0 0.0
    %425 = vmatprep.subr.mxu0 0.0
    %426 = vmatpush2.msra.mxu0 0.0
    %427 = vmatprep.subr.mxu0 0.0
    %428 = vmatpush2.msra.mxu0 0.0
    %429 = vmatprep.subr.mxu0 0.0
    %430 = vmatpush2.msra.mxu0 0.0
    %431 = vmatprep.subr.mxu0 0.0
    %432 = vmatpush2.msra.mxu0 0.0
    %433 = vmatprep.subr.mxu0 0.0
    %434 = vmatpush2.msra.mxu0 0.0
    %435 = vmatprep.subr.mxu0 0.0
    %436 = vmatpush2.msra.mxu0 0.0
    %437 = vmatprep.mubr.f32.mxu0 0.0
    %438 = vmatmul.mubr.f32.gmra.mxu0 %v351
    %v439 = vpop.f32.mrf.mxu0
    %v440 = vadd.f32 %v372, %v439
    %v441 = vpop.f32.mrf.mxu0
    %442 = vdwg.mxu0
    %v443 = vtanh.pop %v440
    %v444 = vsub.f32 %v440, %v443
    %v445 = vld [vmem:[#allocation11] sm:$0xff]
    %v446 = vld [vmem:[#allocation11 + $0x8] sm:$0xff]
    %v447 = vld [vmem:[#allocation11 + $0x10] sm:$0xff]
    %v448 = vld [vmem:[#allocation11 + $0x18] sm:$0xff]
    %v449 = vld [vmem:[#allocation11 + $0x20] sm:$0xff]
    %v450 = vld [vmem:[#allocation11 + $0x28] sm:$0xff]
    %v451 = vld [vmem:[#allocation11 + $0x30] sm:$0xff]
    %v452 = vld [vmem:[#allocation11 + $0x38] sm:$0xff]
    %v453 = vld [vmem:[#allocation11 + $0x40] sm:$0xff]
    %v454 = vld [vmem:[#allocation11 + $0x48] sm:$0xff]
    %v455 = vld [vmem:[#allocation11 + $0x50] sm:$0xff]
    %v456 = vld [vmem:[#allocation11 + $0x58] sm:$0xff]
    %v457 = vld [vmem:[#allocation11 + $0x60] sm:$0xff]
    %v458 = vld [vmem:[#allocation11 + $0x68] sm:$0xff]
    %v459 = vld [vmem:[#allocation11 + $0x70] sm:$0xff]
    %v460 = vld [vmem:[#allocation11 + $0x78] sm:$0xff]
    %v461 = vld [vmem:[%s6] sm:$0x1]
    %v462 = vlaneseq
    %v463 = vshrl.u32 %v462, 7
    %v464 = vsub.s32 0, %v463
    %v465 = vrot.slane %v461, %v464
    %466 = vmatprep.subr.mxu0 0.0
    %467 = vmatpush1.msra.mxu0 %v460
    %468 = vmatprep.subr.mxu0 0.0
    %469 = vmatpush1.msra.mxu0 %v459
    %470 = vmatprep.subr.mxu0 0.0
    %471 = vmatpush1.msra.mxu0 %v458
    %472 = vmatprep.subr.mxu0 0.0
    %473 = vmatpush1.msra.mxu0 %v457
    %474 = vmatprep.subr.mxu0 0.0
    %475 = vmatpush1.msra.mxu0 %v456
    %476 = vmatprep.subr.mxu0 0.0
    %477 = vmatpush1.msra.mxu0 %v455
    %478 = vmatprep.subr.mxu0 0.0
    %479 = vmatpush1.msra.mxu0 %v454
    %480 = vmatprep.subr.mxu0 0.0
    %481 = vmatpush1.msra.mxu0 %v453
    %482 = vmatprep.subr.mxu0 0.0
    %483 = vmatpush1.msra.mxu0 %v452
    %484 = vmatprep.subr.mxu0 0.0
    %485 = vmatpush1.msra.mxu0 %v451
    %486 = vmatprep.subr.mxu0 0.0
    %487 = vmatpush1.msra.mxu0 %v450
    %488 = vmatprep.subr.mxu0 0.0
    %489 = vmatpush1.msra.mxu0 %v449
    %490 = vmatprep.subr.mxu0 0.0
    %491 = vmatpush1.msra.mxu0 %v448
    %492 = vmatprep.subr.mxu0 0.0
    %493 = vmatpush1.msra.mxu0 %v447
    %494 = vmatprep.subr.mxu0 0.0
    %495 = vmatpush1.msra.mxu0 %v446
    %496 = vmatprep.subr.mxu0 0.0
    %497 = vmatpush1.msra.mxu0 %v445
    %498 = vmatprep.subr.mxu0 0.0
    %499 = vmatpush2.msra.mxu0 0.0
    %500 = vmatprep.subr.mxu0 0.0
    %501 = vmatpush2.msra.mxu0 0.0
    %502 = vmatprep.subr.mxu0 0.0
    %503 = vmatpush2.msra.mxu0 0.0
    %504 = vmatprep.subr.mxu0 0.0
    %505 = vmatpush2.msra.mxu0 0.0
    %506 = vmatprep.subr.mxu0 0.0
    %507 = vmatpush2.msra.mxu0 0.0
    %508 = vmatprep.subr.mxu0 0.0
    %509 = vmatpush2.msra.mxu0 0.0
    %510 = vmatprep.subr.mxu0 0.0
    %511 = vmatpush2.msra.mxu0 0.0
    %512 = vmatprep.subr.mxu0 0.0
    %513 = vmatpush2.msra.mxu0 0.0
    %514 = vmatprep.subr.mxu0 0.0
    %515 = vmatpush2.msra.mxu0 0.0
    %516 = vmatprep.subr.mxu0 0.0
    %517 = vmatpush2.msra.mxu0 0.0
    %518 = vmatprep.subr.mxu0 0.0
    %519 = vmatpush2.msra.mxu0 0.0
    %520 = vmatprep.subr.mxu0 0.0
    %521 = vmatpush2.msra.mxu0 0.0
    %522 = vmatprep.subr.mxu0 0.0
    %523 = vmatpush2.msra.mxu0 0.0
    %524 = vmatprep.subr.mxu0 0.0
    %525 = vmatpush2.msra.mxu0 0.0
    %526 = vmatprep.subr.mxu0 0.0
    %527 = vmatpush2.msra.mxu0 0.0
    %528 = vmatprep.subr.mxu0 0.0
    %529 = vmatpush2.msra.mxu0 0.0
    %530 = vmatprep.mubr.f32.mxu0 0.0
    %531 = vmatmul.mubr.f32.gmra.mxu0 %v444
    %v532 = vpop.f32.mrf.mxu0
    %v533 = vadd.f32 %v465, %v532
    %v534 = vpop.f32.mrf.mxu0
    %535 = vdwg.mxu0
    %536 = vst [vmem:[#allocation16] sm:$0xff] %v533
    %v537 = vld [vmem:[#allocation13] sm:$0xff]
    %v538 = vld [vmem:[#allocation13 + $0x8] sm:$0xff]
    %v539 = vld [vmem:[#allocation13 + $0x10] sm:$0xff]
    %v540 = vld [vmem:[#allocation13 + $0x18] sm:$0xff]
    %v541 = vld [vmem:[#allocation13 + $0x20] sm:$0xff]
    %v542 = vld [vmem:[#allocation13 + $0x28] sm:$0xff]
    %v543 = vld [vmem:[#allocation13 + $0x30] sm:$0xff]
    %v544 = vld [vmem:[#allocation13 + $0x38] sm:$0xff]
    %v545 = vld [vmem:[#allocation13 + $0x40] sm:$0xff]
    %v546 = vld [vmem:[#allocation13 + $0x48] sm:$0xff]
    %v547 = vld [vmem:[#allocation13 + $0x50] sm:$0xff]
    %v548 = vld [vmem:[#allocation13 + $0x58] sm:$0xff]
    %v549 = vld [vmem:[#allocation13 + $0x60] sm:$0xff]
    %v550 = vld [vmem:[#allocation13 + $0x68] sm:$0xff]
    %v551 = vld [vmem:[#allocation13 + $0x70] sm:$0xff]
    %v552 = vld [vmem:[#allocation13 + $0x78] sm:$0xff]
    %v553 = vld [vmem:[#allocation14] sm:$0x1]
    %v554 = vlaneseq
    %v555 = vshrl.u32 %v554, 7
    %v556 = vsub.s32 0, %v555
    %v557 = vrot.slane %v553, %v556
    %558 = vmatprep.subr.mxu0 0.0
    %559 = vmatpush1.msra.mxu0 %v552
    %560 = vmatprep.subr.mxu0 0.0
    %561 = vmatpush1.msra.mxu0 %v551
    %562 = vmatprep.subr.mxu0 0.0
    %563 = vmatpush1.msra.mxu0 %v550
    %564 = vmatprep.subr.mxu0 0.0
    %565 = vmatpush1.msra.mxu0 %v549
    %566 = vmatprep.subr.mxu0 0.0
    %567 = vmatpush1.msra.mxu0 %v548
    %568 = vmatprep.subr.mxu0 0.0
    %569 = vmatpush1.msra.mxu0 %v547
    %570 = vmatprep.subr.mxu0 0.0
    %571 = vmatpush1.msra.mxu0 %v546
    %572 = vmatprep.subr.mxu0 0.0
    %573 = vmatpush1.msra.mxu0 %v545
    %574 = vmatprep.subr.mxu0 0.0
    %575 = vmatpush1.msra.mxu0 %v544
    %576 = vmatprep.subr.mxu0 0.0
    %577 = vmatpush1.msra.mxu0 %v543
    %578 = vmatprep.subr.mxu0 0.0
    %579 = vmatpush1.msra.mxu0 %v542
    %580 = vmatprep.subr.mxu0 0.0
    %581 = vmatpush1.msra.mxu0 %v541
    %582 = vmatprep.subr.mxu0 0.0
    %583 = vmatpush1.msra.mxu0 %v540
    %584 = vmatprep.subr.mxu0 0.0
    %585 = vmatpush1.msra.mxu0 %v539
    %586 = vmatprep.subr.mxu0 0.0
    %587 = vmatpush1.msra.mxu0 %v538
    %588 = vmatprep.subr.mxu0 0.0
    %589 = vmatpush1.msra.mxu0 %v537
    %590 = vmatprep.subr.mxu0 0.0
    %591 = vmatpush2.msra.mxu0 0.0
    %592 = vmatprep.subr.mxu0 0.0
    %593 = vmatpush2.msra.mxu0 0.0
    %594 = vmatprep.subr.mxu0 0.0
    %595 = vmatpush2.msra.mxu0 0.0
    %596 = vmatprep.subr.mxu0 0.0
    %597 = vmatpush2.msra.mxu0 0.0
    %598 = vmatprep.subr.mxu0 0.0
    %599 = vmatpush2.msra.mxu0 0.0
    %600 = vmatprep.subr.mxu0 0.0
    %601 = vmatpush2.msra.mxu0 0.0
    %602 = vmatprep.subr.mxu0 0.0
    %603 = vmatpush2.msra.mxu0 0.0
    %604 = vmatprep.subr.mxu0 0.0
    %605 = vmatpush2.msra.mxu0 0.0
    %606 = vmatprep.subr.mxu0 0.0
    %607 = vmatpush2.msra.mxu0 0.0
    %608 = vmatprep.subr.mxu0 0.0
    %609 = vmatpush2.msra.mxu0 0.0
    %610 = vmatprep.subr.mxu0 0.0
    %611 = vmatpush2.msra.mxu0 0.0
    %612 = vmatprep.subr.mxu0 0.0
    %613 = vmatpush2.msra.mxu0 0.0
    %614 = vmatprep.subr.mxu0 0.0
    %615 = vmatpush2.msra.mxu0 0.0
    %616 = vmatprep.subr.mxu0 0.0
    %617 = vmatpush2.msra.mxu0 0.0
    %618 = vmatprep.subr.mxu0 0.0
    %619 = vmatpush2.msra.mxu0 0.0
    %620 = vmatprep.subr.mxu0 0.0
    %621 = vmatpush2.msra.mxu0 0.0
    %622 = vmatprep.mubr.f32.mxu0 0.0
    %623 = vmatmul.mubr.f32.gmra.mxu0 %v444
    %v624 = vpop.f32.mrf.mxu0
    %v625 = vadd.f32 %v557, %v624
    %v626 = vpop.f32.mrf.mxu0
    %627 = vdwg.mxu0
    %p628 = scmp.eq.s32.totalorder 0, 0
    // Predicated region
    $region70: #{tpu_custom_call.1} parent=1 // pred_check
      %p629 = pneg %p628
    $region71: #{tpu_custom_call.1} parent=1 // pred_check_branch
      %631 = sbr.rel (%p629) target = $region73
    $region72: #{tpu_custom_call.1} parent=1 // pred_region
      %632 = vst [vmem:[#allocation17] sm:$0xff] %v625
    $region73: #{tpu_custom_call.1} parent=1 // pred_fallthru
      _
    %p633 = scmp.ne.s32.totalorder 0, 0
    // Predicated region
    $region74: #{tpu_custom_call.1} parent=1 // pred_check
      %p634 = pneg %p633
    $region75: #{tpu_custom_call.1} parent=1 // pred_check_branch
      %636 = sbr.rel (%p634) target = $region77
    $region76: #{tpu_custom_call.1} parent=1 // pred_region
      %v637 = vld [vmem:[#allocation17] sm:$0xff]
      %v638 = vadd.f32 %v637, %v625
      %639 = vst [vmem:[#allocation17] sm:$0xff] %v638
    $region77: #{tpu_custom_call.1} parent=1 // pred_fallthru
      _
    // Predicated region
    $region78: #{tpu_custom_call.1} parent=1 // pred_check
      _
    $region79: #{tpu_custom_call.1} parent=1 // pred_check_branch
      %641 = sbr.rel (0) target = $region81
    $region80: #{tpu_custom_call.1} parent=1 // pred_region
      %s643 = ssub.s32 128, 128
      %644 = vsyncadd [#allocation4], %s643
      %s646 = sshll.u32 [#allocation16], 4
      %s647 = int_to_ptr.vmem [resolvable:$true] %s646
      %649 = dma.vmem_to_hbm [thread:$0]  %s647, 128, %s9, [#allocation4]
    $region81: #{tpu_custom_call.1} parent=1 // pred_fallthru
      _
    // Predicated region
    $region82: #{tpu_custom_call.1} parent=1 // pred_check
      _
    $region83: #{tpu_custom_call.1} parent=1 // pred_check_branch
      %651 = sbr.rel (0) target = $region85
    $region84: #{tpu_custom_call.1} parent=1 // pred_region
      %s653 = ssub.s32 128, 128
      %654 = vsyncadd [#allocation18], %s653
      %s656 = sshll.u32 [#allocation17], 4
      %s657 = int_to_ptr.vmem [resolvable:$true] %s656
      %659 = dma.vmem_to_hbm [thread:$0]  %s657, 128, %s10, [#allocation18]
    $region85: #{tpu_custom_call.1} parent=1 // pred_fallthru
      _
    // Predicated region
    $region86: #{tpu_custom_call.1} parent=1 // pred_check
      _
    $region87: #{tpu_custom_call.1} parent=1 // pred_check_branch
      %661 = sbr.rel (0) target = $region89
    $region88: #{tpu_custom_call.1} parent=1 // pred_region
      %662 = dma.done [#allocation4], 128
    $region89: #{tpu_custom_call.1} parent=1 // pred_fallthru
      _
    // Predicated region
    $region90: #{tpu_custom_call.1} parent=1 // pred_check
      _
    $region91: #{tpu_custom_call.1} parent=1 // pred_check_branch
      %664 = sbr.rel (0) target = $region93
    $region92: #{tpu_custom_call.1} parent=1 // pred_region
      %665 = dma.done [#allocation18], 128
    $region93: #{tpu_custom_call.1} parent=1 // pred_fallthru
      _
    %666 = vsyncpa [#allocation3], 1
    %667 = vsyncpa [#allocation6], 1
    %668 = vsyncpa [#allocation9], 1
    %669 = vsyncpa [#allocation12], 1
    %670 = vsyncpa [#allocation15], 1
    %671 = vsyncpa [#allocation4], 1
    %672 = vsyncpa [#allocation18], 1

</llo_original>
